<compile_context>
chip_gen: v7x
topology: tpu7x:2x2x1
jax: 0.10.0
libtpu: 0.0.40
codegen_flags: <defaults>
</compile_context>

<pallas_src>
import jax
import jax.numpy as jnp
from jax.experimental import pallas as pl
from jax.experimental.pallas import tpu as pltpu


def _round_up(x, m):
    return ((x + m - 1) // m) * m


def _lane_pad(n):
    return _round_up(n, 128)


def _vmem_working_budget_bytes():
    """Per-TensorCore VMEM working budget with headroom for compiler scratch."""
    cap = None
    try:  # capability probe only (not the kernel call)
        cap = getattr(pltpu.get_tpu_info(), "vmem_capacity_bytes", None)
    except Exception:
        cap = None
    if cap is None:
        kind = ""
        try:
            kind = jax.devices()[0].device_kind.lower()
        except Exception:
            pass
        cap = (64 << 20) if "v7" in kind else (128 << 20)
    # ~48 MiB working budget on 64-MiB parts (v7x), ~96 MiB on 128-MiB parts.
    return (48 << 20) if cap <= (64 << 20) else (96 << 20)


def _legal_tile(requested, dim, granule):
    """Largest legal batch tile <= `requested`: either a multiple of `granule`
    (< dim; ragged last block is masked) or the full extent `dim`."""
    t = _round_up(max(1, min(int(requested), dim)), granule)
    return dim if t >= dim else t


def qvalue_kernel(x_ref, w1_ref, b1_ref, w2_ref, b2_ref, out_ref):
    # fc1 + ReLU: MXU matmul with f32 accumulation; bias-add and ReLU stay in
    # f32 on the VPU (v5e has no bf16 VPU).
    h = jnp.dot(x_ref[...], w1_ref[...], preferred_element_type=jnp.float32)
    h = jnp.maximum(h + b1_ref[...], 0.0)
    # fc2: downcast h to the weight dtype (cheap pack) for the MXU, accumulate
    # in f32, add the f32 bias, cast once at the final store.
    q = jnp.dot(h.astype(w2_ref.dtype), w2_ref[...],
                preferred_element_type=jnp.float32) + b2_ref[...]
    out_ref[...] = q.astype(out_ref.dtype)


def _call_kernel(x, w1, b1, w2, b2, *, tb, vmem_limit_bytes):
    B, state_dim = x.shape
    hidden_dim = w1.shape[1]
    out_cols = w2.shape[1]

    def const_spec(shape):
        # Grid-invariant operand: constant index_map => DMA'd once, resident
        # in VMEM across all grid steps.
        return pl.BlockSpec(shape, lambda i: (0, 0))

    return pl.pallas_call(
        qvalue_kernel,
        out_shape=jax.ShapeDtypeStruct((B, out_cols), jnp.float32),
        grid_spec=pltpu.PrefetchScalarGridSpec(
            num_scalar_prefetch=0,
            grid=(pl.cdiv(B, tb),),
            in_specs=[
                pl.BlockSpec((tb, state_dim), lambda i: (i, 0)),   # x tile
                const_spec((state_dim, hidden_dim)),               # W1
                const_spec((1, hidden_dim)),                       # b1
                const_spec((hidden_dim, out_cols)),                # W2 (lane-padded)
                const_spec((1, out_cols)),                         # b2 (lane-padded)
            ],
            out_specs=pl.BlockSpec((tb, out_cols), lambda i: (i, 0)),
        ),
        compiler_params=pltpu.CompilerParams(
            dimension_semantics=("parallel",),
            vmem_limit_bytes=vmem_limit_bytes,
        ),
    )(x, w1, b1, w2, b2)


def qvalue_forward(x, params, *, batch_tile=None, compute_dtype=jnp.bfloat16,
                   lane_dense_out=True, vmem_limit_bytes=None):
    """QValueNet forward: x (B, state_dim) -> q (B, action_dim) in float32."""
    w1, b1, w2, b2 = params
    B, state_dim = x.shape
    hidden_dim = w1.shape[1]
    action_dim = w2.shape[1]

    # Storage dtype for the batch-scaled stream (x) and weights; MXU always
    # accumulates in f32, biases and VPU math stay f32.
    if compute_dtype is None:
        compute_dtype = x.dtype
    x = x.astype(compute_dtype)
    w1 = w1.astype(compute_dtype)
    w2 = w2.astype(compute_dtype)
    b1 = b1.astype(jnp.float32).reshape(1, hidden_dim)
    b2 = b2.astype(jnp.float32).reshape(1, action_dim)

    # Lane-dense output: pad fc2's output columns to a multiple of 128 so the
    # kernel issues unmasked lane-dense stores and a dense output DMA (the pad
    # is compute-free on the MXU); pad columns are sliced off after the call.
    out_cols = action_dim
    if lane_dense_out and action_dim % 128 != 0:
        out_cols = _lane_pad(action_dim)
        w2 = jnp.pad(w2, ((0, 0), (0, out_cols - action_dim)))
        b2 = jnp.pad(b2, ((0, 0), (0, out_cols - action_dim)))

    x_isz = jnp.dtype(compute_dtype).itemsize
    granule = {4: 8, 2: 16, 1: 32}.get(x_isz, 8)   # sublane packing per dtype

    # --- VMEM-budget-derived batch tile -----------------------------------
    budget = _vmem_working_budget_bytes()
    # Weights are grid-invariant but default double-buffered; count 2 copies.
    weight_bytes = 2 * (
        (_round_up(state_dim, 8) * _lane_pad(hidden_dim)
         + _round_up(hidden_dim, 8) * _lane_pad(out_cols)) * x_isz
        + 8 * (_lane_pad(hidden_dim) + _lane_pad(out_cols)) * 4)
    per_row = (2 * _lane_pad(state_dim) * x_isz   # x tile, double-buffered
               + 2 * _lane_pad(out_cols) * 4      # out tile (f32), double-buffered
               + _lane_pad(hidden_dim) * 4        # h intermediate (f32)
               + _lane_pad(out_cols) * 4)         # q intermediate (f32)
    avail = max(budget - weight_bytes - (4 << 20), per_row * granule)
    tb_cap = max(granule, min(8192, (avail // per_row) // granule * granule))

    if batch_tile is not None:
        tb = _legal_tile(batch_tile, B, granule)
    elif B > tb_cap:
        tb = tb_cap
    else:
        # Batch fits the budget in one step; still prefer two steps so the
        # "parallel" axis can shard across v7x's two TensorCores and the
        # second tile's DMA overlaps the first tile's compute.
        tb = _legal_tile(pl.cdiv(B, 2), B, granule)

    if vmem_limit_bytes is None:
        est = weight_bytes + per_row * tb
        vmem_limit_bytes = int(min(max(2 * est, 16 << 20), budget))

    out = _call_kernel(x, w1, b1, w2, b2, tb=tb,
                       vmem_limit_bytes=vmem_limit_bytes)
    if out_cols != action_dim:
        out = out[:, :action_dim]
    return out


def init_params(key, state_dim, hidden_dim, action_dim):
    """Synthetic init mirroring torch.nn.Linear (weights stored transposed as
    (in_features, out_features); biases 1-D)."""
    ks = jax.random.split(key, 4)

    def uinit(k, shape, fan_in):
        bound = 1.0 / jnp.sqrt(jnp.float32(fan_in))
        return jax.random.uniform(k, shape, jnp.float32, -bound, bound)

    w1 = uinit(ks[0], (state_dim, hidden_dim), state_dim)
    b1 = uinit(ks[1], (hidden_dim,), state_dim)
    w2 = uinit(ks[2], (hidden_dim, action_dim), hidden_dim)
    b2 = uinit(ks[3], (action_dim,), hidden_dim)
    return (w1, b1, w2, b2)


def reference_forward(x, params, dtype=jnp.float32):
    w1, b1, w2, b2 = params
    x = x.astype(dtype)
    w1 = w1.astype(dtype)
    w2 = w2.astype(dtype)
    h = jnp.maximum(
        jnp.dot(x, w1, preferred_element_type=jnp.float32) + b1, 0.0)
    return jnp.dot(h.astype(dtype), w2,
                   preferred_element_type=jnp.float32) + b2


if __name__ == "__main__":
    state_dim, hidden_dim, action_dim = 16, 32, 4

    key = jax.random.PRNGKey(0)
    kx1, kx2, kp = jax.random.split(key, 3)
    params = init_params(kp, state_dim, hidden_dim, action_dim)

    # Case 1: small aligned batch, f32 storage (tight tolerance), 1 grid step.
    x1 = jax.random.normal(kx1, (8, state_dim), jnp.float32)
    out1 = jax.block_until_ready(
        qvalue_forward(x1, params, compute_dtype=jnp.float32))
    ref1 = reference_forward(x1, params)
    assert out1.shape == (8, action_dim)
    assert jnp.allclose(out1, ref1, atol=1e-5, rtol=1e-5), "mismatch (case 1)"

    # Case 2: ragged batch + explicit small tile -> cdiv grid with a masked
    # last block, f32 storage, tight tolerance.
    x2 = jax.random.normal(kx2, (20, state_dim), jnp.float32)
    out2 = jax.block_until_ready(
        qvalue_forward(x2, params, batch_tile=8, compute_dtype=jnp.float32))
    ref2 = reference_forward(x2, params)
    assert out2.shape == (20, action_dim)
    assert jnp.allclose(out2, ref2, atol=1e-5, rtol=1e-5), "mismatch (case 2)"

    # Case 3: default path (bf16 x/weights, f32 MXU accumulation), ragged
    # batch, auto tile -> two grid steps; compare to a bf16-storage reference.
    out3 = jax.block_until_ready(qvalue_forward(x2, params))
    ref3 = reference_forward(x2, params, dtype=jnp.bfloat16)
    assert out3.shape == (20, action_dim)
    assert jnp.allclose(out3, ref3, atol=2e-2, rtol=2e-2), "mismatch (case 3)"

    print("KERNEL_OK")
</pallas_src>

<mosaic_0001>
module attributes {stable_mosaic.version = 11 : i64} {
  func.func @qvalue_kernel(%arg0: i32, %arg1: memref<8x16xf32, #tpu.memory_space<vmem>>, %arg2: memref<16x32xf32, #tpu.memory_space<vmem>>, %arg3: memref<1x32xf32, #tpu.memory_space<vmem>>, %arg4: memref<32x128xf32, #tpu.memory_space<vmem>>, %arg5: memref<1x128xf32, #tpu.memory_space<vmem>>, %arg6: memref<8x128xf32, #tpu.memory_space<vmem>>) attributes {dimension_semantics = [#tpu.dimension_semantics<parallel>], iteration_bounds = array<i64: 1>, scalar_prefetch = 0 : i64, scratch_operands = 0 : i64, tpu.core_type = #tpu.core_type<tc>, window_params = [{transform_indices = @transform_0, window_bounds = array<i64: 8, 16>}, {pipeline_mode = #tpu.pipeline_mode<synchronous>, transform_indices = @transform_1, window_bounds = array<i64: 16, 32>}, {pipeline_mode = #tpu.pipeline_mode<synchronous>, transform_indices = @transform_2, window_bounds = array<i64: 1, 32>}, {pipeline_mode = #tpu.pipeline_mode<synchronous>, transform_indices = @transform_3, window_bounds = array<i64: 32, 128>}, {pipeline_mode = #tpu.pipeline_mode<synchronous>, transform_indices = @transform_4, window_bounds = array<i64: 1, 128>}, {transform_indices = @transform_5, window_bounds = array<i64: 8, 128>}]} {
    %c0 = arith.constant 0 : index
    %c0_0 = arith.constant 0 : index
    %0 = vector.load %arg1[%c0, %c0_0] : memref<8x16xf32, #tpu.memory_space<vmem>>, vector<8x16xf32>
    %c0_1 = arith.constant 0 : index
    %c0_2 = arith.constant 0 : index
    %1 = vector.load %arg2[%c0_1, %c0_2] : memref<16x32xf32, #tpu.memory_space<vmem>>, vector<16x32xf32>
    %cst = arith.constant dense<0.000000e+00> : vector<8x32xf32>
    %2 = tpu.matmul %0, %1, %cst {dimension_numbers = #tpu.dot_dimension_numbers<[1], [0], [0], [1], [0, 0, 1, 1], [], []>} : vector<8x16xf32>, vector<16x32xf32>, vector<8x32xf32> -> vector<8x32xf32>
    %c0_3 = arith.constant 0 : index
    %c0_4 = arith.constant 0 : index
    %3 = vector.load %arg3[%c0_3, %c0_4] : memref<1x32xf32, #tpu.memory_space<vmem>>, vector<1x32xf32>
    %4 = vector.broadcast %3 : vector<1x32xf32> to vector<8x32xf32>
    %5 = arith.addf %2, %4 : vector<8x32xf32>
    %cst_5 = arith.constant 0.000000e+00 : f32
    %6 = vector.broadcast %cst_5 : f32 to vector<8x32xf32>
    %7 = arith.maximumf %5, %6 : vector<8x32xf32>
    %c0_6 = arith.constant 0 : index
    %c0_7 = arith.constant 0 : index
    %8 = vector.load %arg4[%c0_6, %c0_7] : memref<32x128xf32, #tpu.memory_space<vmem>>, vector<32x128xf32>
    %cst_8 = arith.constant dense<0.000000e+00> : vector<8x128xf32>
    %9 = tpu.matmul %7, %8, %cst_8 {dimension_numbers = #tpu.dot_dimension_numbers<[1], [0], [0], [1], [0, 0, 1, 1], [], []>} : vector<8x32xf32>, vector<32x128xf32>, vector<8x128xf32> -> vector<8x128xf32>
    %c0_9 = arith.constant 0 : index
    %c0_10 = arith.constant 0 : index
    %10 = vector.load %arg5[%c0_9, %c0_10] : memref<1x128xf32, #tpu.memory_space<vmem>>, vector<1x128xf32>
    %11 = vector.broadcast %10 : vector<1x128xf32> to vector<8x128xf32>
    %12 = arith.addf %9, %11 : vector<8x128xf32>
    %c0_11 = arith.constant 0 : index
    %c0_12 = arith.constant 0 : index
    %13 = vector.load %arg6[%c0_11, %c0_12] : memref<8x128xf32, #tpu.memory_space<vmem>>, vector<8x128xf32>
    tpu.vector_store %arg6[%c0_11, %c0_12], %12 {strides = array<i32>} : memref<8x128xf32, #tpu.memory_space<vmem>>, vector<8x128xf32>,
    return
  }
  func.func @transform_0(%arg0: i32) -> (i32, i32) {
    %c0_i32 = arith.constant 0 : i32
    %c0_i32_0 = arith.constant 0 : i32
    return %arg0, %c0_i32 : i32, i32
  }
  func.func @transform_1(%arg0: i32) -> (i32, i32) {
    %c0_i32 = arith.constant 0 : i32
    %c0_i32_0 = arith.constant 0 : i32
    %c0_i32_1 = arith.constant 0 : i32
    return %c0_i32, %c0_i32_0 : i32, i32
  }
  func.func @transform_2(%arg0: i32) -> (i32, i32) {
    %c0_i32 = arith.constant 0 : i32
    %c0_i32_0 = arith.constant 0 : i32
    %c0_i32_1 = arith.constant 0 : i32
    return %c0_i32, %c0_i32_0 : i32, i32
  }
  func.func @transform_3(%arg0: i32) -> (i32, i32) {
    %c0_i32 = arith.constant 0 : i32
    %c0_i32_0 = arith.constant 0 : i32
    %c0_i32_1 = arith.constant 0 : i32
    return %c0_i32, %c0_i32_0 : i32, i32
  }
  func.func @transform_4(%arg0: i32) -> (i32, i32) {
    %c0_i32 = arith.constant 0 : i32
    %c0_i32_0 = arith.constant 0 : i32
    %c0_i32_1 = arith.constant 0 : i32
    return %c0_i32, %c0_i32_0 : i32, i32
  }
  func.func @transform_5(%arg0: i32) -> (i32, i32) {
    %c0_i32 = arith.constant 0 : i32
    %c0_i32_0 = arith.constant 0 : i32
    return %arg0, %c0_i32 : i32, i32
  }
}

</mosaic_0001>

<llo_original>
// kernel: tpu_custom_call.1
$region0: #{tpu_custom_call.1}
  #allocation0 [shape = 'u32[]', space=smem, size = 0x4, offset = 0x4, fixed_abs, tag = 'smem constant byte address 0x4 - core index']
  #allocation1 [shape = 'u32[144,128]{1,0:T(1,128)}', space=vmem, size = 0x12000, scoped, tag = 'internal scratch']
  %s0 = inlined_call_operand.hbm [shape: f32[8,16], index: 0, kind: input, shape index: {}]
  %s1 = inlined_call_operand.hbm [shape: f32[16,32], index: 1, kind: input, shape index: {}]
  %s2 = inlined_call_operand.vmem [shape: f32[1,32], index: 2, kind: input, shape index: {}]
  %s3 = inlined_call_operand.hbm [shape: f32[32,128], index: 3, kind: input, shape index: {}]
  %s4 = inlined_call_operand.vmem [shape: f32[1,128], index: 4, kind: input, shape index: {}]
  %s5 = inlined_call_operand.hbm [shape: f32[8,128], index: 5, kind: output, shape index: {}]
  %s6 = sld [smem:[#allocation0]]
  $region42: #{tpu_custom_call.1} parent=0
    _
  %s8 = ssub.s32 1, %s6
  %s9 = scalar_select 0, %s8, %s6
  $region1: #{tpu_custom_call.1} parent=0
    #allocation2 [shape = 'u8[4096]{0}', space=vmem, size = 0x1000, scoped, tag = 'input window, operand 0, single buffered']
    #allocation3 [shape = 's32[1]{0}', space=sflag, size = 0x4, scoped, tag = 'scoped memory for tpu_custom_call.1']
    #allocation4 [shape = 's32[1]{0}', space=sflag, size = 0x4, scoped, tag = 'scoped memory for tpu_custom_call.1']
    #allocation5 [shape = 'u8[8192]{0}', space=vmem, size = 0x2000, scoped, tag = 'input window, operand 1, single buffered']
    #allocation6 [shape = 's32[1]{0}', space=sflag, size = 0x4, scoped, tag = 'scoped memory for tpu_custom_call.1']
    #allocation7 [shape = 'u8[16384]{0}', space=vmem, size = 0x4000, scoped, tag = 'input window, operand 3, single buffered']
    #allocation8 [shape = 'u8[4096]{0}', space=vmem, size = 0x1000, scoped, tag = 'output window, operand 0, single buffered']
    %10 = vsyncpa [#allocation3], 0
    %11 = vsyncpa [#allocation6], 0
    %12 = vsyncpa [#allocation4], 0
    // Predicated region
    $region2: #{tpu_custom_call.1} parent=1 // pred_check
      _
    $region3: #{tpu_custom_call.1} parent=1 // pred_check_branch
      %14 = sbr.rel (0) target = $region5
    $region4: #{tpu_custom_call.1} parent=1 // pred_region
      %s16 = ssub.s32 128, 128
      %17 = vsyncadd [#allocation3], %s16
      %s19 = sshll.u32 [#allocation2], 4
      %s20 = int_to_ptr.vmem [resolvable:$true] %s19
      %22 = dma.hbm_to_vmem [thread:$0]  %s0, 128, %s20, [#allocation3]
    $region5: #{tpu_custom_call.1} parent=1 // pred_fallthru
      _
    // Predicated region
    $region6: #{tpu_custom_call.1} parent=1 // pred_check
      _
    $region7: #{tpu_custom_call.1} parent=1 // pred_check_branch
      %24 = sbr.rel (0) target = $region9
    $region8: #{tpu_custom_call.1} parent=1 // pred_region
      %s26 = ssub.s32 256, 256
      %27 = vsyncadd [#allocation6], %s26
      %s28 = sshll.u32 [#allocation5], 4
      %s29 = int_to_ptr.vmem [resolvable:$true] %s28
      %34 = dma.hbm_to_vmem [thread:$0]  %s1, 256, %s29, [#allocation6], 128, 128, 8
    $region9: #{tpu_custom_call.1} parent=1 // pred_fallthru
      _
    // Predicated region
    $region10: #{tpu_custom_call.1} parent=1 // pred_check
      _
    $region11: #{tpu_custom_call.1} parent=1 // pred_check_branch
      %36 = sbr.rel (0) target = $region13
    $region12: #{tpu_custom_call.1} parent=1 // pred_region
      _
    $region13: #{tpu_custom_call.1} parent=1 // pred_fallthru
      _
    // Predicated region
    $region14: #{tpu_custom_call.1} parent=1 // pred_check
      _
    $region15: #{tpu_custom_call.1} parent=1 // pred_check_branch
      %38 = sbr.rel (0) target = $region17
    $region16: #{tpu_custom_call.1} parent=1 // pred_region
      %s40 = ssub.s32 512, 512
      %41 = vsyncadd [#allocation6], %s40
      %s42 = sshll.u32 [#allocation7], 4
      %s43 = int_to_ptr.vmem [resolvable:$true] %s42
      %48 = dma.hbm_to_vmem [thread:$0]  %s3, 512, %s43, [#allocation6], 128, 128, 8
    $region17: #{tpu_custom_call.1} parent=1 // pred_fallthru
      _
    // Predicated region
    $region18: #{tpu_custom_call.1} parent=1 // pred_check
      _
    $region19: #{tpu_custom_call.1} parent=1 // pred_check_branch
      %50 = sbr.rel (0) target = $region21
    $region20: #{tpu_custom_call.1} parent=1 // pred_region
      _
    $region21: #{tpu_custom_call.1} parent=1 // pred_fallthru
      _
    // Predicated region
    $region22: #{tpu_custom_call.1} parent=1 // pred_check
      _
    $region23: #{tpu_custom_call.1} parent=1 // pred_check_branch
      %52 = sbr.rel (0) target = $region25
    $region24: #{tpu_custom_call.1} parent=1 // pred_region
      %53 = dma.done [#allocation3], 128
    $region25: #{tpu_custom_call.1} parent=1 // pred_fallthru
      _
    // Predicated region
    $region26: #{tpu_custom_call.1} parent=1 // pred_check
      _
    $region27: #{tpu_custom_call.1} parent=1 // pred_check_branch
      %55 = sbr.rel (0) target = $region29
    $region28: #{tpu_custom_call.1} parent=1 // pred_region
      %56 = dma.done [#allocation6], 256
    $region29: #{tpu_custom_call.1} parent=1 // pred_fallthru
      _
    // Predicated region
    $region30: #{tpu_custom_call.1} parent=1 // pred_check
      _
    $region31: #{tpu_custom_call.1} parent=1 // pred_check_branch
      %58 = sbr.rel (0) target = $region33
    $region32: #{tpu_custom_call.1} parent=1 // pred_region
      %59 = dma.done [#allocation6], 512
    $region33: #{tpu_custom_call.1} parent=1 // pred_fallthru
      _
    %v60 = vld [vmem:[#allocation2] sm:$0xff]
    %v61 = vld [vmem:[#allocation5] sm:$0xff]
    %v62 = vld [vmem:[#allocation5 + $0x8] sm:$0xff]
    %v63 = vld [vmem:[%s2] sm:$0x1]
    %v65 = vlaneseq
    %v66 = vshrl.u32 %v65, 7
    %v67 = vsub.s32 0, %v66
    %v68 = vrot.slane %v63, %v67
    %vm70 = vcmask 130048
    %v72 = vsel %vm70, %v60, 0
    %74 = vmatprep.subr.mxu0 0.0
    %75 = vmatpush1.msra.mxu0 %v61
    %76 = vmatprep.subr.mxu0 0.0
    %77 = vmatpush1.msra.mxu0 %v62
    %78 = vmatprep.subr.mxu0 0.0
    %79 = vmatpush1.msra.mxu0 0.0
    %80 = vmatprep.subr.mxu0 0.0
    %81 = vmatpush1.msra.mxu0 0.0
    %82 = vmatprep.subr.mxu0 0.0
    %83 = vmatpush1.msra.mxu0 0.0
    %84 = vmatprep.subr.mxu0 0.0
    %85 = vmatpush1.msra.mxu0 0.0
    %86 = vmatprep.subr.mxu0 0.0
    %87 = vmatpush1.msra.mxu0 0.0
    %88 = vmatprep.subr.mxu0 0.0
    %89 = vmatpush1.msra.mxu0 0.0
    %90 = vmatprep.subr.mxu0 0.0
    %91 = vmatpush1.msra.mxu0 0.0
    %92 = vmatprep.subr.mxu0 0.0
    %93 = vmatpush1.msra.mxu0 0.0
    %94 = vmatprep.subr.mxu0 0.0
    %95 = vmatpush1.msra.mxu0 0.0
    %96 = vmatprep.subr.mxu0 0.0
    %97 = vmatpush1.msra.mxu0 0.0
    %98 = vmatprep.subr.mxu0 0.0
    %99 = vmatpush1.msra.mxu0 0.0
    %100 = vmatprep.subr.mxu0 0.0
    %101 = vmatpush1.msra.mxu0 0.0
    %102 = vmatprep.subr.mxu0 0.0
    %103 = vmatpush1.msra.mxu0 0.0
    %104 = vmatprep.subr.mxu0 0.0
    %105 = vmatpush1.msra.mxu0 0.0
    %106 = vmatprep.subr.mxu0 0.0
    %107 = vmatpush1.msra.mxu0 0.0
    %108 = vmatprep.subr.mxu0 0.0
    %109 = vmatpush1.msra.mxu0 0.0
    %110 = vmatprep.subr.mxu0 0.0
    %111 = vmatpush1.msra.mxu0 0.0
    %112 = vmatprep.subr.mxu0 0.0
    %113 = vmatpush1.msra.mxu0 0.0
    %114 = vmatprep.subr.mxu0 0.0
    %115 = vmatpush1.msra.mxu0 0.0
    %116 = vmatprep.subr.mxu0 0.0
    %117 = vmatpush1.msra.mxu0 0.0
    %118 = vmatprep.subr.mxu0 0.0
    %119 = vmatpush1.msra.mxu0 0.0
    %120 = vmatprep.subr.mxu0 0.0
    %121 = vmatpush1.msra.mxu0 0.0
    %122 = vmatprep.subr.mxu0 0.0
    %123 = vmatpush1.msra.mxu0 0.0
    %124 = vmatprep.subr.mxu0 0.0
    %125 = vmatpush1.msra.mxu0 0.0
    %126 = vmatprep.subr.mxu0 0.0
    %127 = vmatpush1.msra.mxu0 0.0
    %128 = vmatprep.subr.mxu0 0.0
    %129 = vmatpush1.msra.mxu0 0.0
    %130 = vmatprep.subr.mxu0 0.0
    %131 = vmatpush1.msra.mxu0 0.0
    %132 = vmatprep.subr.mxu0 0.0
    %133 = vmatpush1.msra.mxu0 0.0
    %134 = vmatprep.subr.mxu0 0.0
    %135 = vmatpush1.msra.mxu0 0.0
    %136 = vmatprep.subr.mxu0 0.0
    %137 = vmatpush1.msra.mxu0 0.0
    %138 = vmatprep.mubr.f32.mxu0 0.0
    %139 = vmatmul.mubr.f32.gmra.mrb[0].mxu0 %v72
    %v140 = vpop.f32.mrb[0].mxu0
    %v141 = vadd.f32 %v68, %v140
    %v142 = vpop.f32.mrb[0].mxu0
    %143 = vdwg.mxu0
    %v144 = vmax.f32 %v141, 0.0
    %v145 = vld [vmem:[#allocation7] sm:$0xff]
    %v146 = vld [vmem:[#allocation7 + $0x8] sm:$0xff]
    %v147 = vld [vmem:[#allocation7 + $0x10] sm:$0xff]
    %v148 = vld [vmem:[#allocation7 + $0x18] sm:$0xff]
    %v149 = vld [vmem:[%s4] sm:$0x1]
    %v151 = vlaneseq
    %v152 = vshrl.u32 %v151, 7
    %v153 = vsub.s32 0, %v152
    %v154 = vrot.slane %v149, %v153
    %vm156 = vcmask 261120
    %v158 = vsel %vm156, %v144, 0
    %160 = vmatprep.subr.mxu0 0.0
    %161 = vmatpush1.msra.mxu0 %v145
    %162 = vmatprep.subr.mxu0 0.0
    %163 = vmatpush1.msra.mxu0 %v146
    %164 = vmatprep.subr.mxu0 0.0
    %165 = vmatpush1.msra.mxu0 %v147
    %166 = vmatprep.subr.mxu0 0.0
    %167 = vmatpush1.msra.mxu0 %v148
    %168 = vmatprep.subr.mxu0 0.0
    %169 = vmatpush1.msra.mxu0 0.0
    %170 = vmatprep.subr.mxu0 0.0
    %171 = vmatpush1.msra.mxu0 0.0
    %172 = vmatprep.subr.mxu0 0.0
    %173 = vmatpush1.msra.mxu0 0.0
    %174 = vmatprep.subr.mxu0 0.0
    %175 = vmatpush1.msra.mxu0 0.0
    %176 = vmatprep.subr.mxu0 0.0
    %177 = vmatpush1.msra.mxu0 0.0
    %178 = vmatprep.subr.mxu0 0.0
    %179 = vmatpush1.msra.mxu0 0.0
    %180 = vmatprep.subr.mxu0 0.0
    %181 = vmatpush1.msra.mxu0 0.0
    %182 = vmatprep.subr.mxu0 0.0
    %183 = vmatpush1.msra.mxu0 0.0
    %184 = vmatprep.subr.mxu0 0.0
    %185 = vmatpush1.msra.mxu0 0.0
    %186 = vmatprep.subr.mxu0 0.0
    %187 = vmatpush1.msra.mxu0 0.0
    %188 = vmatprep.subr.mxu0 0.0
    %189 = vmatpush1.msra.mxu0 0.0
    %190 = vmatprep.subr.mxu0 0.0
    %191 = vmatpush1.msra.mxu0 0.0
    %192 = vmatprep.subr.mxu0 0.0
    %193 = vmatpush1.msra.mxu0 0.0
    %194 = vmatprep.subr.mxu0 0.0
    %195 = vmatpush1.msra.mxu0 0.0
    %196 = vmatprep.subr.mxu0 0.0
    %197 = vmatpush1.msra.mxu0 0.0
    %198 = vmatprep.subr.mxu0 0.0
    %199 = vmatpush1.msra.mxu0 0.0
    %200 = vmatprep.subr.mxu0 0.0
    %201 = vmatpush1.msra.mxu0 0.0
    %202 = vmatprep.subr.mxu0 0.0
    %203 = vmatpush1.msra.mxu0 0.0
    %204 = vmatprep.subr.mxu0 0.0
    %205 = vmatpush1.msra.mxu0 0.0
    %206 = vmatprep.subr.mxu0 0.0
    %207 = vmatpush1.msra.mxu0 0.0
    %208 = vmatprep.subr.mxu0 0.0
    %209 = vmatpush1.msra.mxu0 0.0
    %210 = vmatprep.subr.mxu0 0.0
    %211 = vmatpush1.msra.mxu0 0.0
    %212 = vmatprep.subr.mxu0 0.0
    %213 = vmatpush1.msra.mxu0 0.0
    %214 = vmatprep.subr.mxu0 0.0
    %215 = vmatpush1.msra.mxu0 0.0
    %216 = vmatprep.subr.mxu0 0.0
    %217 = vmatpush1.msra.mxu0 0.0
    %218 = vmatprep.subr.mxu0 0.0
    %219 = vmatpush1.msra.mxu0 0.0
    %220 = vmatprep.subr.mxu0 0.0
    %221 = vmatpush1.msra.mxu0 0.0
    %222 = vmatprep.subr.mxu0 0.0
    %223 = vmatpush1.msra.mxu0 0.0
    %224 = vmatprep.mubr.f32.mxu0 0.0
    %225 = vmatmul.mubr.f32.gmra.mrb[0].mxu0 %v158
    %v226 = vpop.f32.mrb[0].mxu0
    %v227 = vadd.f32 %v154, %v226
    %v228 = vpop.f32.mrb[0].mxu0
    %229 = vdwg.mxu0
    %230 = vst [vmem:[#allocation8] sm:$0xff] %v227
    // Predicated region
    $region34: #{tpu_custom_call.1} parent=1 // pred_check
      _
    $region35: #{tpu_custom_call.1} parent=1 // pred_check_branch
      %232 = sbr.rel (0) target = $region37
    $region36: #{tpu_custom_call.1} parent=1 // pred_region
      %s234 = ssub.s32 128, 128
      %235 = vsyncadd [#allocation4], %s234
      %s237 = sshll.u32 [#allocation8], 4
      %s238 = int_to_ptr.vmem [resolvable:$true] %s237
      %240 = dma.vmem_to_hbm [thread:$0]  %s238, 128, %s5, [#allocation4]
    $region37: #{tpu_custom_call.1} parent=1 // pred_fallthru
      _
    // Predicated region
    $region38: #{tpu_custom_call.1} parent=1 // pred_check
      _
    $region39: #{tpu_custom_call.1} parent=1 // pred_check_branch
      %242 = sbr.rel (0) target = $region41
    $region40: #{tpu_custom_call.1} parent=1 // pred_region
      %243 = dma.done [#allocation4], 128
    $region41: #{tpu_custom_call.1} parent=1 // pred_fallthru
      _
    %244 = vsyncpa [#allocation3], 1
    %245 = vsyncpa [#allocation6], 1
    %246 = vsyncpa [#allocation4], 1

</llo_original>
